<compile_context>
chip_gen: v7x
topology: tpu7x:2x2x1
jax: 0.10.0
libtpu: 0.0.40
codegen_flags: <defaults>
</compile_context>

<pallas_src>
import functools

import jax
import jax.numpy as jnp
from jax import lax
from jax.experimental import pallas as pl
from jax.experimental.pallas import tpu as pltpu

HID = 128          # FCEncoder hidden width == lane-padded width of everything
SLAB_ROWS = 144    # 128 weight rows + 1 bias row, padded up to a multiple of 16
                   # so the bf16 slab stays (16,128)-tile aligned.


# ----------------------------------------------------------------------------
# Fused kernel
# ----------------------------------------------------------------------------
def make_fused_kernel(temperature):
    temperature = float(temperature)

    def fused_kernel(x_ref, y_ref, xw_ref, yw_ref, out_ref):
        def encode(z_f32, w_ref):
            # bf16 MXU operands, f32 accumulation; bias/relu in f32 (v5e-safe).
            h = z_f32.astype(jnp.bfloat16)
            for l in range(3):                                # static unroll
                w_l = w_ref[l]                                # (144, 128) bf16
                w = w_l[:HID, :]                              # (128, 128) bf16
                b = w_l[HID:HID + 1, :].astype(jnp.float32)   # (1, 128) f32
                h = jnp.dot(h, w, preferred_element_type=jnp.float32) + b
                h = jnp.maximum(h, 0.0)
                if l < 2:
                    h = h.astype(jnp.bfloat16)
            return h                                          # (N, 128) f32

        # --- Encoders: stay in VMEM/registers, no HBM round-trip ------------
        x_enc = encode(x_ref[...], xw_ref)
        y_enc = encode(y_ref[...], yw_ref)
        n = x_enc.shape[0]

        # --- InfoNCE ---------------------------------------------------------
        # Positive logits elementwise (no diag gather, no transpose).
        pos = jnp.sum(x_enc * y_enc, axis=-1, keepdims=True)          # (N, 1)

        # sim[i, j] = y_i . x_j via "nt" dot_general (contract last dims).
        sim = lax.dot_general(
            y_enc, x_enc,
            dimension_numbers=(((1,), (1,)), ((), ())),
            preferred_element_type=jnp.float32)                        # (N, N)

        # Diagonal mask to -10 (matches reference semantics).
        row = lax.broadcasted_iota(jnp.int32, (n, n), 0)
        col = lax.broadcasted_iota(jnp.int32, (n, n), 1)
        neg = jnp.where(row == col, jnp.float32(-10.0), sim)           # (N, N)

        # Temperature: trace-time skip when == 1.0.
        if temperature != 1.0:
            t = jnp.float32(temperature)
            pos = pos * t
            neg = neg * t

        # Stabilized log-softmax over the virtual (N, N+1) logits, without
        # materializing the concatenation.
        m = jnp.maximum(jnp.max(neg, axis=1, keepdims=True), pos)      # (N, 1)
        sum_exp = jnp.exp(pos - m) + jnp.sum(jnp.exp(neg - m), axis=1,
                                             keepdims=True)            # (N, 1)
        lse = m + jnp.log(sum_exp)                                     # (N, 1)

        out_ref[0, 0] = -jnp.sum(pos - lse) / jnp.float32(n)

    return fused_kernel


# ----------------------------------------------------------------------------
# Wrapper
# ----------------------------------------------------------------------------
@functools.partial(jax.jit, static_argnames=("temperature",))
def contrastive_loss_forward(x_pad, y_pad, x_slab, y_slab, temperature=1.0):
    """Fused forward: both FCEncoders + InfoNCE loss in one pallas_call.

    x_pad, y_pad : (N, 128) f32   observations zero-padded to 128 lanes
    x_slab, y_slab : (3, 144, 128) bf16 packed encoder params (W rows 0..127,
                     bias row 128, zero padding elsewhere)
    """
    n = x_pad.shape[0]
    flops = 2 * 3 * 2 * n * HID * HID + 2 * n * n * HID + 2 * n * HID
    bytes_accessed = ((x_pad.size + y_pad.size) * 4
                      + (x_slab.size + y_slab.size) * 2 + 4)
    loss = pl.pallas_call(
        make_fused_kernel(temperature),
        out_shape=jax.ShapeDtypeStruct((1, 1), jnp.float32),
        in_specs=[pl.BlockSpec(memory_space=pltpu.MemorySpace.VMEM)] * 4,
        out_specs=pl.BlockSpec(memory_space=pltpu.MemorySpace.SMEM),
        cost_estimate=pl.CostEstimate(flops=flops,
                                      transcendentals=n * (n + 2),
                                      bytes_accessed=bytes_accessed),
    )(x_pad, y_pad, x_slab, y_slab)
    return loss[0, 0]


# ----------------------------------------------------------------------------
# Parameter setup / host-side packing + pure-JAX reference
# ----------------------------------------------------------------------------
def init_fc_encoder_params(key, obs_dim, encode_shape, heads):
    sizes = [obs_dim, 128, 128, encode_shape * heads]
    keys = jax.random.split(key, 3)
    params = []
    for i in range(3):
        fan_in, fan_out = sizes[i], sizes[i + 1]
        w = jax.random.normal(keys[i], (fan_in, fan_out), jnp.float32) / jnp.sqrt(fan_in)
        b = jnp.zeros((1, fan_out), jnp.float32)
        params += [w, b]
    return tuple(params)


def pack_encoder_params(params, obs_dim, out_dim, dtype=jnp.bfloat16):
    """Pack 3x(W, b) into one lane-dense (3, SLAB_ROWS, 128) slab.

    slab[l, :128, :] = W_l zero-padded to (128, 128)
    slab[l, 128, :]  = b_l zero-padded to 128 lanes
    """
    w1, b1, w2, b2, w3, b3 = params
    slab = jnp.zeros((3, SLAB_ROWS, HID), jnp.float32)
    slab = slab.at[0, :obs_dim, :].set(w1)
    slab = slab.at[0, HID, :].set(b1[0])
    slab = slab.at[1, :HID, :].set(w2)
    slab = slab.at[1, HID, :].set(b2[0])
    slab = slab.at[2, :HID, :out_dim].set(w3)
    slab = slab.at[2, HID, :out_dim].set(b3[0])
    return slab.astype(dtype)


def pad_obs(z, width=HID):
    n, d = z.shape
    return jnp.zeros((n, width), jnp.float32).at[:, :d].set(z)


def reference_forward(x_pad, y_pad, x_slab, y_slab, temperature=1.0):
    """Pure-JAX mirror (same bf16 weight/activation rounding as the kernel)."""
    def enc(z, slab):
        slab = slab.astype(jnp.float32)
        h = z.astype(jnp.bfloat16).astype(jnp.float32)
        for l in range(3):
            w = slab[l, :HID, :]
            b = slab[l, HID, :]
            h = jnp.maximum(h @ w + b, 0.0)
            if l < 2:
                h = h.astype(jnp.bfloat16).astype(jnp.float32)
        return h

    xe, ye = enc(x_pad, x_slab), enc(y_pad, y_slab)
    n = x_pad.shape[0]
    u_pos = jnp.sum(xe * ye, axis=-1, keepdims=True)            # (N, 1)
    u_all = ye @ xe.T                                           # (N, N)
    eye = jnp.eye(n, dtype=jnp.float32)
    u_neg = (1.0 - eye) * u_all - 10.0 * eye
    logits = jnp.concatenate([u_pos, u_neg], axis=1) * temperature
    logp = jax.nn.log_softmax(logits, axis=1)
    return -jnp.mean(logp[:, 0])


if __name__ == "__main__":
    N = 8           # batch
    OBS_DIM = 16    # flat observation dim (FCEncoder path)
    ENCODE_SHAPE = 32
    HEADS = [1, 1]
    TEMPERATURE = 1.0

    key = jax.random.PRNGKey(0)
    kx, ky, kpx, kpy = jax.random.split(key, 4)
    x = jax.random.normal(kx, (N, OBS_DIM), jnp.float32)
    y = x ** 2 + 0.01 * jax.random.normal(ky, (N, OBS_DIM), jnp.float32)

    x_params = init_fc_encoder_params(kpx, OBS_DIM, ENCODE_SHAPE, HEADS[0])
    y_params = init_fc_encoder_params(kpy, OBS_DIM, ENCODE_SHAPE, HEADS[1])

    # Host-side packing: pad obs to 128 lanes, pack each encoder into one bf16 slab.
    x_pad, y_pad = pad_obs(x), pad_obs(y)
    x_slab = pack_encoder_params(x_params, OBS_DIM, ENCODE_SHAPE * HEADS[0])
    y_slab = pack_encoder_params(y_params, OBS_DIM, ENCODE_SHAPE * HEADS[1])

    loss = contrastive_loss_forward(x_pad, y_pad, x_slab, y_slab, TEMPERATURE)
    loss = jax.block_until_ready(loss)

    ref = reference_forward(x_pad, y_pad, x_slab, y_slab, TEMPERATURE)
    # Only accumulation-order differences remain (kernel/reference use identical
    # bf16 rounding of weights/activations); vs a pure-f32 reference use ~1e-2.
    assert jnp.allclose(loss, ref, rtol=1e-4, atol=1e-4), (loss, ref)

    print("KERNEL_OK")
</pallas_src>

<mosaic_0001>
module attributes {stable_mosaic.version = 11 : i64} {
  func.func @fused_kernel(%arg0: memref<8x128xf32, #tpu.memory_space<vmem>>, %arg1: memref<8x128xf32, #tpu.memory_space<vmem>>, %arg2: memref<3x144x128xbf16, #tpu.memory_space<vmem>>, %arg3: memref<3x144x128xbf16, #tpu.memory_space<vmem>>, %arg4: memref<1x1xf32, #tpu.memory_space<smem>>) attributes {dimension_semantics = [], scalar_prefetch = 0 : i64, scratch_operands = 0 : i64, tpu.core_type = #tpu.core_type<tc>} {
    %c0 = arith.constant 0 : index
    %c0_0 = arith.constant 0 : index
    %0 = vector.load %arg0[%c0, %c0_0] : memref<8x128xf32, #tpu.memory_space<vmem>>, vector<8x128xf32>
    %1 = arith.truncf %0 : vector<8x128xf32> to vector<8x128xbf16>
    %c0_1 = arith.constant 0 : index
    %c0_2 = arith.constant 0 : index
    %c0_3 = arith.constant 0 : index
    %2 = vector.load %arg2[%c0_1, %c0_2, %c0_3] : memref<3x144x128xbf16, #tpu.memory_space<vmem>>, vector<1x144x128xbf16>
    %3 = vector.shape_cast %2 : vector<1x144x128xbf16> to vector<144x128xbf16>
    %4 = vector.extract_strided_slice %3 {offsets = [0, 0], sizes = [128, 128], strides = [1, 1]} : vector<144x128xbf16> to vector<128x128xbf16>
    %5 = vector.extract_strided_slice %3 {offsets = [128, 0], sizes = [1, 128], strides = [1, 1]} : vector<144x128xbf16> to vector<1x128xbf16>
    %6 = arith.extf %5 : vector<1x128xbf16> to vector<1x128xf32>
    %cst = arith.constant dense<0.000000e+00> : vector<8x128xf32>
    %7 = tpu.matmul %1, %4, %cst {dimension_numbers = #tpu.dot_dimension_numbers<[1], [0], [0], [1], [0, 0, 1, 1], [], []>} : vector<8x128xbf16>, vector<128x128xbf16>, vector<8x128xf32> -> vector<8x128xf32>
    %8 = vector.broadcast %6 : vector<1x128xf32> to vector<8x128xf32>
    %9 = arith.addf %7, %8 : vector<8x128xf32>
    %cst_4 = arith.constant 0.000000e+00 : f32
    %10 = vector.broadcast %cst_4 : f32 to vector<8x128xf32>
    %11 = arith.maximumf %9, %10 : vector<8x128xf32>
    %12 = arith.truncf %11 : vector<8x128xf32> to vector<8x128xbf16>
    %c1 = arith.constant 1 : index
    %c0_5 = arith.constant 0 : index
    %c0_6 = arith.constant 0 : index
    %13 = vector.load %arg2[%c1, %c0_5, %c0_6] : memref<3x144x128xbf16, #tpu.memory_space<vmem>>, vector<1x144x128xbf16>
    %14 = vector.shape_cast %13 : vector<1x144x128xbf16> to vector<144x128xbf16>
    %15 = vector.extract_strided_slice %14 {offsets = [0, 0], sizes = [128, 128], strides = [1, 1]} : vector<144x128xbf16> to vector<128x128xbf16>
    %16 = vector.extract_strided_slice %14 {offsets = [128, 0], sizes = [1, 128], strides = [1, 1]} : vector<144x128xbf16> to vector<1x128xbf16>
    %17 = arith.extf %16 : vector<1x128xbf16> to vector<1x128xf32>
    %cst_7 = arith.constant dense<0.000000e+00> : vector<8x128xf32>
    %18 = tpu.matmul %12, %15, %cst_7 {dimension_numbers = #tpu.dot_dimension_numbers<[1], [0], [0], [1], [0, 0, 1, 1], [], []>} : vector<8x128xbf16>, vector<128x128xbf16>, vector<8x128xf32> -> vector<8x128xf32>
    %19 = vector.broadcast %17 : vector<1x128xf32> to vector<8x128xf32>
    %20 = arith.addf %18, %19 : vector<8x128xf32>
    %cst_8 = arith.constant 0.000000e+00 : f32
    %21 = vector.broadcast %cst_8 : f32 to vector<8x128xf32>
    %22 = arith.maximumf %20, %21 : vector<8x128xf32>
    %23 = arith.truncf %22 : vector<8x128xf32> to vector<8x128xbf16>
    %c2 = arith.constant 2 : index
    %c0_9 = arith.constant 0 : index
    %c0_10 = arith.constant 0 : index
    %24 = vector.load %arg2[%c2, %c0_9, %c0_10] : memref<3x144x128xbf16, #tpu.memory_space<vmem>>, vector<1x144x128xbf16>
    %25 = vector.shape_cast %24 : vector<1x144x128xbf16> to vector<144x128xbf16>
    %26 = vector.extract_strided_slice %25 {offsets = [0, 0], sizes = [128, 128], strides = [1, 1]} : vector<144x128xbf16> to vector<128x128xbf16>
    %27 = vector.extract_strided_slice %25 {offsets = [128, 0], sizes = [1, 128], strides = [1, 1]} : vector<144x128xbf16> to vector<1x128xbf16>
    %28 = arith.extf %27 : vector<1x128xbf16> to vector<1x128xf32>
    %cst_11 = arith.constant dense<0.000000e+00> : vector<8x128xf32>
    %29 = tpu.matmul %23, %26, %cst_11 {dimension_numbers = #tpu.dot_dimension_numbers<[1], [0], [0], [1], [0, 0, 1, 1], [], []>} : vector<8x128xbf16>, vector<128x128xbf16>, vector<8x128xf32> -> vector<8x128xf32>
    %30 = vector.broadcast %28 : vector<1x128xf32> to vector<8x128xf32>
    %31 = arith.addf %29, %30 : vector<8x128xf32>
    %cst_12 = arith.constant 0.000000e+00 : f32
    %32 = vector.broadcast %cst_12 : f32 to vector<8x128xf32>
    %33 = arith.maximumf %31, %32 : vector<8x128xf32>
    %c0_13 = arith.constant 0 : index
    %c0_14 = arith.constant 0 : index
    %34 = vector.load %arg1[%c0_13, %c0_14] : memref<8x128xf32, #tpu.memory_space<vmem>>, vector<8x128xf32>
    %35 = arith.truncf %34 : vector<8x128xf32> to vector<8x128xbf16>
    %c0_15 = arith.constant 0 : index
    %c0_16 = arith.constant 0 : index
    %c0_17 = arith.constant 0 : index
    %36 = vector.load %arg3[%c0_15, %c0_16, %c0_17] : memref<3x144x128xbf16, #tpu.memory_space<vmem>>, vector<1x144x128xbf16>
    %37 = vector.shape_cast %36 : vector<1x144x128xbf16> to vector<144x128xbf16>
    %38 = vector.extract_strided_slice %37 {offsets = [0, 0], sizes = [128, 128], strides = [1, 1]} : vector<144x128xbf16> to vector<128x128xbf16>
    %39 = vector.extract_strided_slice %37 {offsets = [128, 0], sizes = [1, 128], strides = [1, 1]} : vector<144x128xbf16> to vector<1x128xbf16>
    %40 = arith.extf %39 : vector<1x128xbf16> to vector<1x128xf32>
    %cst_18 = arith.constant dense<0.000000e+00> : vector<8x128xf32>
    %41 = tpu.matmul %35, %38, %cst_18 {dimension_numbers = #tpu.dot_dimension_numbers<[1], [0], [0], [1], [0, 0, 1, 1], [], []>} : vector<8x128xbf16>, vector<128x128xbf16>, vector<8x128xf32> -> vector<8x128xf32>
    %42 = vector.broadcast %40 : vector<1x128xf32> to vector<8x128xf32>
    %43 = arith.addf %41, %42 : vector<8x128xf32>
    %cst_19 = arith.constant 0.000000e+00 : f32
    %44 = vector.broadcast %cst_19 : f32 to vector<8x128xf32>
    %45 = arith.maximumf %43, %44 : vector<8x128xf32>
    %46 = arith.truncf %45 : vector<8x128xf32> to vector<8x128xbf16>
    %c1_20 = arith.constant 1 : index
    %c0_21 = arith.constant 0 : index
    %c0_22 = arith.constant 0 : index
    %47 = vector.load %arg3[%c1_20, %c0_21, %c0_22] : memref<3x144x128xbf16, #tpu.memory_space<vmem>>, vector<1x144x128xbf16>
    %48 = vector.shape_cast %47 : vector<1x144x128xbf16> to vector<144x128xbf16>
    %49 = vector.extract_strided_slice %48 {offsets = [0, 0], sizes = [128, 128], strides = [1, 1]} : vector<144x128xbf16> to vector<128x128xbf16>
    %50 = vector.extract_strided_slice %48 {offsets = [128, 0], sizes = [1, 128], strides = [1, 1]} : vector<144x128xbf16> to vector<1x128xbf16>
    %51 = arith.extf %50 : vector<1x128xbf16> to vector<1x128xf32>
    %cst_23 = arith.constant dense<0.000000e+00> : vector<8x128xf32>
    %52 = tpu.matmul %46, %49, %cst_23 {dimension_numbers = #tpu.dot_dimension_numbers<[1], [0], [0], [1], [0, 0, 1, 1], [], []>} : vector<8x128xbf16>, vector<128x128xbf16>, vector<8x128xf32> -> vector<8x128xf32>
    %53 = vector.broadcast %51 : vector<1x128xf32> to vector<8x128xf32>
    %54 = arith.addf %52, %53 : vector<8x128xf32>
    %cst_24 = arith.constant 0.000000e+00 : f32
    %55 = vector.broadcast %cst_24 : f32 to vector<8x128xf32>
    %56 = arith.maximumf %54, %55 : vector<8x128xf32>
    %57 = arith.truncf %56 : vector<8x128xf32> to vector<8x128xbf16>
    %c2_25 = arith.constant 2 : index
    %c0_26 = arith.constant 0 : index
    %c0_27 = arith.constant 0 : index
    %58 = vector.load %arg3[%c2_25, %c0_26, %c0_27] : memref<3x144x128xbf16, #tpu.memory_space<vmem>>, vector<1x144x128xbf16>
    %59 = vector.shape_cast %58 : vector<1x144x128xbf16> to vector<144x128xbf16>
    %60 = vector.extract_strided_slice %59 {offsets = [0, 0], sizes = [128, 128], strides = [1, 1]} : vector<144x128xbf16> to vector<128x128xbf16>
    %61 = vector.extract_strided_slice %59 {offsets = [128, 0], sizes = [1, 128], strides = [1, 1]} : vector<144x128xbf16> to vector<1x128xbf16>
    %62 = arith.extf %61 : vector<1x128xbf16> to vector<1x128xf32>
    %cst_28 = arith.constant dense<0.000000e+00> : vector<8x128xf32>
    %63 = tpu.matmul %57, %60, %cst_28 {dimension_numbers = #tpu.dot_dimension_numbers<[1], [0], [0], [1], [0, 0, 1, 1], [], []>} : vector<8x128xbf16>, vector<128x128xbf16>, vector<8x128xf32> -> vector<8x128xf32>
    %64 = vector.broadcast %62 : vector<1x128xf32> to vector<8x128xf32>
    %65 = arith.addf %63, %64 : vector<8x128xf32>
    %cst_29 = arith.constant 0.000000e+00 : f32
    %66 = vector.broadcast %cst_29 : f32 to vector<8x128xf32>
    %67 = arith.maximumf %65, %66 : vector<8x128xf32>
    %68 = arith.mulf %33, %67 : vector<8x128xf32>
    %cst_30 = arith.constant dense<0.000000e+00> : vector<8xf32>
    %69 = vector.multi_reduction <add>, %68, %cst_30 [1] : vector<8x128xf32> to vector<8xf32>
    %70 = vector.shape_cast %69 : vector<8xf32> to vector<8x1xf32>
    %cst_31 = arith.constant dense<0.000000e+00> : vector<8x8xf32>
    %71 = tpu.matmul %67, %33, %cst_31 {dimension_numbers = #tpu.dot_dimension_numbers<[1], [1], [0], [0], [0, 0, 1, 0], [], []>} : vector<8x128xf32>, vector<8x128xf32>, vector<8x8xf32> -> vector<8x8xf32>
    %72 = tpu.iota {dimensions = array<i32: 0>} : vector<8x8xi32>
    %73 = tpu.iota {dimensions = array<i32: 1>} : vector<8x8xi32>
    %74 = arith.cmpi eq, %72, %73 : vector<8x8xi32>
    %cst_32 = arith.constant -1.000000e+01 : f32
    %75 = vector.broadcast %cst_32 : f32 to vector<8x8xf32>
    %76 = arith.select %74, %75, %71 : vector<8x8xi1>, vector<8x8xf32>
    %cst_33 = arith.constant dense<0xFF800000> : vector<8xf32>
    %77 = vector.multi_reduction <maximumf>, %76, %cst_33 [1] : vector<8x8xf32> to vector<8xf32>
    %78 = vector.shape_cast %77 : vector<8xf32> to vector<8x1xf32>
    %79 = arith.maximumf %78, %70 : vector<8x1xf32>
    %80 = arith.subf %70, %79 : vector<8x1xf32>
    %81 = math.exp %80 : vector<8x1xf32>
    %82 = vector.broadcast %79 : vector<8x1xf32> to vector<8x8xf32>
    %83 = arith.subf %76, %82 : vector<8x8xf32>
    %84 = math.exp %83 : vector<8x8xf32>
    %cst_34 = arith.constant dense<0.000000e+00> : vector<8xf32>
    %85 = vector.multi_reduction <add>, %84, %cst_34 [1] : vector<8x8xf32> to vector<8xf32>
    %86 = vector.shape_cast %85 : vector<8xf32> to vector<8x1xf32>
    %87 = arith.addf %81, %86 : vector<8x1xf32>
    %88 = math.log %87 : vector<8x1xf32>
    %89 = arith.addf %79, %88 : vector<8x1xf32>
    %90 = arith.subf %70, %89 : vector<8x1xf32>
    %91 = vector.shape_cast %90 : vector<8x1xf32> to vector<1x8x1xf32>
    %cst_35 = arith.constant dense<0.000000e+00> : vector<1xf32>
    %92 = vector.multi_reduction <add>, %91, %cst_35 [1, 2] : vector<1x8x1xf32> to vector<1xf32>
    %93 = vector.shape_cast %92 : vector<1xf32> to vector<1x1x1xf32>
    %94 = vector.extract %93[0, 0, 0] : f32 from vector<1x1x1xf32>
    %cst_36 = arith.constant 0.000000e+00 : f32
    %95 = arith.subf %cst_36, %94 : f32
    %cst_37 = arith.constant 8.000000e+00 : f32
    %96 = arith.divf %95, %cst_37 : f32
    %c0_38 = arith.constant 0 : index
    %c0_39 = arith.constant 0 : index
    %97 = memref.load %arg4[%c0_38, %c0_39] : memref<1x1xf32, #tpu.memory_space<smem>>
    memref.store %96, %arg4[%c0_38, %c0_39] : memref<1x1xf32, #tpu.memory_space<smem>>
    return
  }
}

</mosaic_0001>

<llo_original>
// kernel: contrastive_loss_forward.1
$region0: #{contrastive_loss_forward.1}
  #allocation0 [shape = 'u32[]', space=smem, size = 0x4, offset = 0x4, fixed_abs, tag = 'smem constant byte address 0x4 - core index']
  #allocation1 [shape = 'u32[144,128]{1,0:T(1,128)}', space=vmem, size = 0x12000, scoped, tag = 'internal scratch']
  %s0 = inlined_call_operand.hbm [shape: f32[8,128], index: 0, kind: input, shape index: {}]
  %s1 = inlined_call_operand.hbm [shape: f32[8,128], index: 1, kind: input, shape index: {}]
  %s2 = inlined_call_operand.hbm [shape: bf16[3,144,128], index: 2, kind: input, shape index: {}]
  %s3 = inlined_call_operand.hbm [shape: bf16[3,144,128], index: 3, kind: input, shape index: {}]
  %s4 = inlined_call_operand.hbm [shape: f32[1,1], index: 4, kind: output, shape index: {}]
  %s5 = sld [smem:[#allocation0]]
  $region42: #{contrastive_loss_forward.1} parent=0
    _
  %s7 = ssub.s32 1, %s5
  %s8 = scalar_select 0, %s7, %s5
  $region1: #{contrastive_loss_forward.1} parent=0
    #allocation2 [shape = 'u8[4096]{0}', space=vmem, size = 0x1000, scoped, tag = 'input window, operand 0, single buffered']
    #allocation3 [shape = 's32[1]{0}', space=sflag, size = 0x4, scoped, tag = 'scoped memory for contrastive_loss_forward.1']
    #allocation4 [shape = 's32[1]{0}', space=sflag, size = 0x4, scoped, tag = 'scoped memory for contrastive_loss_forward.1']
    #allocation5 [shape = 'u8[4096]{0}', space=vmem, size = 0x1000, scoped, tag = 'input window, operand 1, single buffered']
    #allocation6 [shape = 's32[1]{0}', space=sflag, size = 0x4, scoped, tag = 'scoped memory for contrastive_loss_forward.1']
    #allocation7 [shape = 'u8[110592]{0}', space=vmem, size = 0x1b000, scoped, tag = 'input window, operand 2, single buffered']
    #allocation8 [shape = 'u8[110592]{0}', space=vmem, size = 0x1b000, scoped, tag = 'input window, operand 3, single buffered']
    #allocation9 [shape = 's32[1]{0}', space=sflag, size = 0x4, scoped, tag = 'scoped memory for contrastive_loss_forward.1']
    #allocation10 [shape = 'u8[512]{0}', space=smem, size = 0x200, scoped, tag = 'output window, operand 0, single buffered']
    %9 = vsyncpa [#allocation3], 0
    %10 = vsyncpa [#allocation6], 0
    %11 = vsyncpa [#allocation9], 0
    %12 = vsyncpa [#allocation4], 0
    // Predicated region
    $region2: #{contrastive_loss_forward.1} parent=1 // pred_check
      _
    $region3: #{contrastive_loss_forward.1} parent=1 // pred_check_branch
      %14 = sbr.rel (0) target = $region5
    $region4: #{contrastive_loss_forward.1} parent=1 // pred_region
      %s16 = ssub.s32 128, 128
      %17 = vsyncadd [#allocation3], %s16
      %s19 = sshll.u32 [#allocation2], 4
      %s20 = int_to_ptr.vmem [resolvable:$true] %s19
      %22 = dma.hbm_to_vmem [thread:$0]  %s0, 128, %s20, [#allocation3]
    $region5: #{contrastive_loss_forward.1} parent=1 // pred_fallthru
      _
    // Predicated region
    $region6: #{contrastive_loss_forward.1} parent=1 // pred_check
      _
    $region7: #{contrastive_loss_forward.1} parent=1 // pred_check_branch
      %24 = sbr.rel (0) target = $region9
    $region8: #{contrastive_loss_forward.1} parent=1 // pred_region
      %s26 = ssub.s32 128, 128
      %27 = vsyncadd [#allocation6], %s26
      %s29 = sshll.u32 [#allocation5], 4
      %s30 = int_to_ptr.vmem [resolvable:$true] %s29
      %32 = dma.hbm_to_vmem [thread:$0]  %s1, 128, %s30, [#allocation6]
    $region9: #{contrastive_loss_forward.1} parent=1 // pred_fallthru
      _
    // Predicated region
    $region10: #{contrastive_loss_forward.1} parent=1 // pred_check
      _
    $region11: #{contrastive_loss_forward.1} parent=1 // pred_check_branch
      %34 = sbr.rel (0) target = $region13
    $region12: #{contrastive_loss_forward.1} parent=1 // pred_region
      %s36 = ssub.s32 3456, 3456
      %37 = vsyncadd [#allocation6], %s36
      %s38 = sshll.u32 [#allocation7], 4
      %s39 = int_to_ptr.vmem [resolvable:$true] %s38
      %44 = dma.hbm_to_vmem [thread:$0]  %s2, 3456, %s39, [#allocation6], 64, 64, 4
    $region13: #{contrastive_loss_forward.1} parent=1 // pred_fallthru
      _
    // Predicated region
    $region14: #{contrastive_loss_forward.1} parent=1 // pred_check
      _
    $region15: #{contrastive_loss_forward.1} parent=1 // pred_check_branch
      %46 = sbr.rel (0) target = $region17
    $region16: #{contrastive_loss_forward.1} parent=1 // pred_region
      %s48 = ssub.s32 3456, 3456
      %49 = vsyncadd [#allocation9], %s48
      %s50 = sshll.u32 [#allocation8], 4
      %s51 = int_to_ptr.vmem [resolvable:$true] %s50
      %56 = dma.hbm_to_vmem [thread:$0]  %s3, 3456, %s51, [#allocation9], 64, 64, 4
    $region17: #{contrastive_loss_forward.1} parent=1 // pred_fallthru
      _
    // Predicated region
    $region18: #{contrastive_loss_forward.1} parent=1 // pred_check
      _
    $region19: #{contrastive_loss_forward.1} parent=1 // pred_check_branch
      %58 = sbr.rel (0) target = $region21
    $region20: #{contrastive_loss_forward.1} parent=1 // pred_region
      %59 = dma.done [#allocation3], 128
    $region21: #{contrastive_loss_forward.1} parent=1 // pred_fallthru
      _
    // Predicated region
    $region22: #{contrastive_loss_forward.1} parent=1 // pred_check
      _
    $region23: #{contrastive_loss_forward.1} parent=1 // pred_check_branch
      %61 = sbr.rel (0) target = $region25
    $region24: #{contrastive_loss_forward.1} parent=1 // pred_region
      %62 = dma.done [#allocation6], 128
    $region25: #{contrastive_loss_forward.1} parent=1 // pred_fallthru
      _
    // Predicated region
    $region26: #{contrastive_loss_forward.1} parent=1 // pred_check
      _
    $region27: #{contrastive_loss_forward.1} parent=1 // pred_check_branch
      %64 = sbr.rel (0) target = $region29
    $region28: #{contrastive_loss_forward.1} parent=1 // pred_region
      %65 = dma.done [#allocation6], 3456
    $region29: #{contrastive_loss_forward.1} parent=1 // pred_fallthru
      _
    // Predicated region
    $region30: #{contrastive_loss_forward.1} parent=1 // pred_check
      _
    $region31: #{contrastive_loss_forward.1} parent=1 // pred_check_branch
      %67 = sbr.rel (0) target = $region33
    $region32: #{contrastive_loss_forward.1} parent=1 // pred_region
      %68 = dma.done [#allocation9], 3456
    $region33: #{contrastive_loss_forward.1} parent=1 // pred_fallthru
      _
    %v70 = vld [vmem:[#allocation2] sm:$0xff]
    %v71 = vpack.c.bf16 %v70, %v70
    %v72 = vld [vmem:[#allocation7] sm:$0xf]
    %v73 = vld [vmem:[#allocation7 + $0x4] sm:$0xf]
    %v74 = vld [vmem:[#allocation7 + $0x8] sm:$0xf]
    %v75 = vld [vmem:[#allocation7 + $0xc] sm:$0xf]
    %v76 = vld [vmem:[#allocation7 + $0x10] sm:$0xf]
    %v77 = vld [vmem:[#allocation7 + $0x14] sm:$0xf]
    %v78 = vld [vmem:[#allocation7 + $0x18] sm:$0xf]
    %v79 = vld [vmem:[#allocation7 + $0x1c] sm:$0xf]
    %v80 = vld [vmem:[#allocation7 + $0x20] sm:$0xf]
    %v81 = vld [vmem:[#allocation7 + $0x24] sm:$0xf]
    %v82 = vld [vmem:[#allocation7 + $0x28] sm:$0xf]
    %v83 = vld [vmem:[#allocation7 + $0x2c] sm:$0xf]
    %v84 = vld [vmem:[#allocation7 + $0x30] sm:$0xf]
    %v85 = vld [vmem:[#allocation7 + $0x34] sm:$0xf]
    %v86 = vld [vmem:[#allocation7 + $0x38] sm:$0xf]
    %v87 = vld [vmem:[#allocation7 + $0x3c] sm:$0xf]
    %v88 = vld [vmem:[#allocation7 + $0x40] sm:$0xf]
    %v89 = vunpack.c.l.bf16 %v88
    %v90 = vlaneseq
    %v91 = vshrl.u32 %v90, 7
    %v92 = vsub.s32 0, %v91
    %v93 = vrot.slane %v89, %v92
    %v110 = vunpack.c.l.b16 %v72
    %v111 = vunpack.c.l.b16 %v73
    %v112 = vunpack.c.l.b16 %v74
    %v113 = vunpack.c.l.b16 %v75
    %v114 = vunpack.c.l.b16 %v76
    %v115 = vunpack.c.l.b16 %v77
    %v116 = vunpack.c.l.b16 %v78
    %v117 = vunpack.c.l.b16 %v79
    %v118 = vunpack.c.l.b16 %v80
    %v119 = vunpack.c.l.b16 %v81
    %v120 = vunpack.c.l.b16 %v82
    %v121 = vunpack.c.l.b16 %v83
    %v122 = vunpack.c.l.b16 %v84
    %v123 = vunpack.c.l.b16 %v85
    %v124 = vunpack.c.l.b16 %v86
    %v125 = vunpack.c.l.b16 %v87
    %v126 = vpack.c.b16 %v111, %v110
    %v127 = vpack.c.b16 %v113, %v112
    %v128 = vpack.c.b16 %v115, %v114
    %v129 = vpack.c.b16 %v117, %v116
    %v130 = vpack.c.b16 %v119, %v118
    %v131 = vpack.c.b16 %v121, %v120
    %v132 = vpack.c.b16 %v123, %v122
    %v133 = vpack.c.b16 %v125, %v124
    %142 = vmatprep.subr.bf16.mxu0 0
    %143 = vmatpush1.bf16.msra.mxu0 %v126
    %144 = vmatprep.subr.bf16.mxu0 0
    %145 = vmatpush1.bf16.msra.mxu0 %v127
    %146 = vmatprep.subr.bf16.mxu0 0
    %147 = vmatpush1.bf16.msra.mxu0 %v128
    %148 = vmatprep.subr.bf16.mxu0 0
    %149 = vmatpush1.bf16.msra.mxu0 %v129
    %150 = vmatprep.subr.bf16.mxu0 0
    %151 = vmatpush1.bf16.msra.mxu0 %v130
    %152 = vmatprep.subr.bf16.mxu0 0
    %153 = vmatpush1.bf16.msra.mxu0 %v131
    %154 = vmatprep.subr.bf16.mxu0 0
    %155 = vmatpush1.bf16.msra.mxu0 %v132
    %156 = vmatprep.subr.bf16.mxu0 0
    %157 = vmatpush1.bf16.msra.mxu0 %v133
    %158 = vmatprep.subr.bf16.mxu0 0
    %159 = vmatpush1.bf16.msra.mxu0 0
    %160 = vmatprep.subr.bf16.mxu0 0
    %161 = vmatpush1.bf16.msra.mxu0 0
    %162 = vmatprep.subr.bf16.mxu0 0
    %163 = vmatpush1.bf16.msra.mxu0 0
    %164 = vmatprep.subr.bf16.mxu0 0
    %165 = vmatpush1.bf16.msra.mxu0 0
    %166 = vmatprep.subr.bf16.mxu0 0
    %167 = vmatpush1.bf16.msra.mxu0 0
    %168 = vmatprep.subr.bf16.mxu0 0
    %169 = vmatpush1.bf16.msra.mxu0 0
    %170 = vmatprep.subr.bf16.mxu0 0
    %171 = vmatpush1.bf16.msra.mxu0 0
    %172 = vmatprep.subr.bf16.mxu0 0
    %173 = vmatpush1.bf16.msra.mxu0 0
    %174 = vmatprep.mubr.bf16.mxu0 0
    %175 = vmatmul.mubr.bf16.gmra.mrb[0].mxu0 %v71
    %v176 = vpop.f32.mrb[0].mxu0
    %v177 = vadd.f32 %v93, %v176
    %v178 = vpop.f32.mrb[0].mxu0
    %v179 = vpop.f32.mrb[0].mxu0
    %v180 = vpop.f32.mrb[0].mxu0
    %181 = vdwg.mxu0
    %v182 = vmax.f32 %v177, 0.0
    %v183 = vpack.c.bf16 %v182, %v182
    %s184 = scalar_lea.vmem [#allocation7], 72
    %v185 = vld [vmem:[%s184] sm:$0xf]
    %v186 = vld [vmem:[%s184 + $0x4] sm:$0xf]
    %v187 = vld [vmem:[%s184 + $0x8] sm:$0xf]
    %v188 = vld [vmem:[%s184 + $0xc] sm:$0xf]
    %v189 = vld [vmem:[%s184 + $0x10] sm:$0xf]
    %v190 = vld [vmem:[%s184 + $0x14] sm:$0xf]
    %v191 = vld [vmem:[%s184 + $0x18] sm:$0xf]
    %v192 = vld [vmem:[%s184 + $0x1c] sm:$0xf]
    %v193 = vld [vmem:[%s184 + $0x20] sm:$0xf]
    %v194 = vld [vmem:[%s184 + $0x24] sm:$0xf]
    %v195 = vld [vmem:[%s184 + $0x28] sm:$0xf]
    %v196 = vld [vmem:[%s184 + $0x2c] sm:$0xf]
    %v197 = vld [vmem:[%s184 + $0x30] sm:$0xf]
    %v198 = vld [vmem:[%s184 + $0x34] sm:$0xf]
    %v199 = vld [vmem:[%s184 + $0x38] sm:$0xf]
    %v200 = vld [vmem:[%s184 + $0x3c] sm:$0xf]
    %v201 = vld [vmem:[%s184 + $0x40] sm:$0xf]
    %v202 = vunpack.c.l.bf16 %v201
    %v203 = vlaneseq
    %v204 = vshrl.u32 %v203, 7
    %v205 = vsub.s32 0, %v204
    %v206 = vrot.slane %v202, %v205
    %v223 = vunpack.c.l.b16 %v185
    %v224 = vunpack.c.l.b16 %v186
    %v225 = vunpack.c.l.b16 %v187
    %v226 = vunpack.c.l.b16 %v188
    %v227 = vunpack.c.l.b16 %v189
    %v228 = vunpack.c.l.b16 %v190
    %v229 = vunpack.c.l.b16 %v191
    %v230 = vunpack.c.l.b16 %v192
    %v231 = vunpack.c.l.b16 %v193
    %v232 = vunpack.c.l.b16 %v194
    %v233 = vunpack.c.l.b16 %v195
    %v234 = vunpack.c.l.b16 %v196
    %v235 = vunpack.c.l.b16 %v197
    %v236 = vunpack.c.l.b16 %v198
    %v237 = vunpack.c.l.b16 %v199
    %v238 = vunpack.c.l.b16 %v200
    %v239 = vpack.c.b16 %v224, %v223
    %v240 = vpack.c.b16 %v226, %v225
    %v241 = vpack.c.b16 %v228, %v227
    %v242 = vpack.c.b16 %v230, %v229
    %v243 = vpack.c.b16 %v232, %v231
    %v244 = vpack.c.b16 %v234, %v233
    %v245 = vpack.c.b16 %v236, %v235
    %v246 = vpack.c.b16 %v238, %v237
    %255 = vmatprep.subr.bf16.mxu0 0
    %256 = vmatpush1.bf16.msra.mxu0 %v239
    %257 = vmatprep.subr.bf16.mxu0 0
    %258 = vmatpush1.bf16.msra.mxu0 %v240
    %259 = vmatprep.subr.bf16.mxu0 0
    %260 = vmatpush1.bf16.msra.mxu0 %v241
    %261 = vmatprep.subr.bf16.mxu0 0
    %262 = vmatpush1.bf16.msra.mxu0 %v242
    %263 = vmatprep.subr.bf16.mxu0 0
    %264 = vmatpush1.bf16.msra.mxu0 %v243
    %265 = vmatprep.subr.bf16.mxu0 0
    %266 = vmatpush1.bf16.msra.mxu0 %v244
    %267 = vmatprep.subr.bf16.mxu0 0
    %268 = vmatpush1.bf16.msra.mxu0 %v245
    %269 = vmatprep.subr.bf16.mxu0 0
    %270 = vmatpush1.bf16.msra.mxu0 %v246
    %271 = vmatprep.subr.bf16.mxu0 0
    %272 = vmatpush1.bf16.msra.mxu0 0
    %273 = vmatprep.subr.bf16.mxu0 0
    %274 = vmatpush1.bf16.msra.mxu0 0
    %275 = vmatprep.subr.bf16.mxu0 0
    %276 = vmatpush1.bf16.msra.mxu0 0
    %277 = vmatprep.subr.bf16.mxu0 0
    %278 = vmatpush1.bf16.msra.mxu0 0
    %279 = vmatprep.subr.bf16.mxu0 0
    %280 = vmatpush1.bf16.msra.mxu0 0
    %281 = vmatprep.subr.bf16.mxu0 0
    %282 = vmatpush1.bf16.msra.mxu0 0
    %283 = vmatprep.subr.bf16.mxu0 0
    %284 = vmatpush1.bf16.msra.mxu0 0
    %285 = vmatprep.subr.bf16.mxu0 0
    %286 = vmatpush1.bf16.msra.mxu0 0
    %287 = vmatprep.mubr.bf16.mxu0 0
    %288 = vmatmul.mubr.bf16.gmra.mrb[0].mxu0 %v183
    %v289 = vpop.f32.mrb[0].mxu0
    %v290 = vadd.f32 %v206, %v289
    %v291 = vpop.f32.mrb[0].mxu0
    %v292 = vpop.f32.mrb[0].mxu0
    %v293 = vpop.f32.mrb[0].mxu0
    %294 = vdwg.mxu0
    %v295 = vmax.f32 %v290, 0.0
    %v296 = vpack.c.bf16 %v295, %v295
    %s297 = scalar_lea.vmem [#allocation7], 144
    %v298 = vld [vmem:[%s297] sm:$0xf]
    %v299 = vld [vmem:[%s297 + $0x4] sm:$0xf]
    %v300 = vld [vmem:[%s297 + $0x8] sm:$0xf]
    %v301 = vld [vmem:[%s297 + $0xc] sm:$0xf]
    %v302 = vld [vmem:[%s297 + $0x10] sm:$0xf]
    %v303 = vld [vmem:[%s297 + $0x14] sm:$0xf]
    %v304 = vld [vmem:[%s297 + $0x18] sm:$0xf]
    %v305 = vld [vmem:[%s297 + $0x1c] sm:$0xf]
    %v306 = vld [vmem:[%s297 + $0x20] sm:$0xf]
    %v307 = vld [vmem:[%s297 + $0x24] sm:$0xf]
    %v308 = vld [vmem:[%s297 + $0x28] sm:$0xf]
    %v309 = vld [vmem:[%s297 + $0x2c] sm:$0xf]
    %v310 = vld [vmem:[%s297 + $0x30] sm:$0xf]
    %v311 = vld [vmem:[%s297 + $0x34] sm:$0xf]
    %v312 = vld [vmem:[%s297 + $0x38] sm:$0xf]
    %v313 = vld [vmem:[%s297 + $0x3c] sm:$0xf]
    %v314 = vld [vmem:[%s297 + $0x40] sm:$0xf]
    %v315 = vunpack.c.l.bf16 %v314
    %v316 = vlaneseq
    %v317 = vshrl.u32 %v316, 7
    %v318 = vsub.s32 0, %v317
    %v319 = vrot.slane %v315, %v318
    %v336 = vunpack.c.l.b16 %v298
    %v337 = vunpack.c.l.b16 %v299
    %v338 = vunpack.c.l.b16 %v300
    %v339 = vunpack.c.l.b16 %v301
    %v340 = vunpack.c.l.b16 %v302
    %v341 = vunpack.c.l.b16 %v303
    %v342 = vunpack.c.l.b16 %v304
    %v343 = vunpack.c.l.b16 %v305
    %v344 = vunpack.c.l.b16 %v306
    %v345 = vunpack.c.l.b16 %v307
    %v346 = vunpack.c.l.b16 %v308
    %v347 = vunpack.c.l.b16 %v309
    %v348 = vunpack.c.l.b16 %v310
    %v349 = vunpack.c.l.b16 %v311
    %v350 = vunpack.c.l.b16 %v312
    %v351 = vunpack.c.l.b16 %v313
    %v352 = vpack.c.b16 %v337, %v336
    %v353 = vpack.c.b16 %v339, %v338
    %v354 = vpack.c.b16 %v341, %v340
    %v355 = vpack.c.b16 %v343, %v342
    %v356 = vpack.c.b16 %v345, %v344
    %v357 = vpack.c.b16 %v347, %v346
    %v358 = vpack.c.b16 %v349, %v348
    %v359 = vpack.c.b16 %v351, %v350
    %368 = vmatprep.subr.bf16.mxu0 0
    %369 = vmatpush1.bf16.msra.mxu0 %v352
    %370 = vmatprep.subr.bf16.mxu0 0
    %371 = vmatpush1.bf16.msra.mxu0 %v353
    %372 = vmatprep.subr.bf16.mxu0 0
    %373 = vmatpush1.bf16.msra.mxu0 %v354
    %374 = vmatprep.subr.bf16.mxu0 0
    %375 = vmatpush1.bf16.msra.mxu0 %v355
    %376 = vmatprep.subr.bf16.mxu0 0
    %377 = vmatpush1.bf16.msra.mxu0 %v356
    %378 = vmatprep.subr.bf16.mxu0 0
    %379 = vmatpush1.bf16.msra.mxu0 %v357
    %380 = vmatprep.subr.bf16.mxu0 0
    %381 = vmatpush1.bf16.msra.mxu0 %v358
    %382 = vmatprep.subr.bf16.mxu0 0
    %383 = vmatpush1.bf16.msra.mxu0 %v359
    %384 = vmatprep.subr.bf16.mxu0 0
    %385 = vmatpush1.bf16.msra.mxu0 0
    %386 = vmatprep.subr.bf16.mxu0 0
    %387 = vmatpush1.bf16.msra.mxu0 0
    %388 = vmatprep.subr.bf16.mxu0 0
    %389 = vmatpush1.bf16.msra.mxu0 0
    %390 = vmatprep.subr.bf16.mxu0 0
    %391 = vmatpush1.bf16.msra.mxu0 0
    %392 = vmatprep.subr.bf16.mxu0 0
    %393 = vmatpush1.bf16.msra.mxu0 0
    %394 = vmatprep.subr.bf16.mxu0 0
    %395 = vmatpush1.bf16.msra.mxu0 0
    %396 = vmatprep.subr.bf16.mxu0 0
    %397 = vmatpush1.bf16.msra.mxu0 0
    %398 = vmatprep.subr.bf16.mxu0 0
    %399 = vmatpush1.bf16.msra.mxu0 0
    %400 = vmatprep.mubr.bf16.mxu0 0
    %401 = vmatmul.mubr.bf16.gmra.mrb[0].mxu0 %v296
    %v402 = vpop.f32.mrb[0].mxu0
    %v403 = vadd.f32 %v319, %v402
    %v404 = vpop.f32.mrb[0].mxu0
    %v405 = vpop.f32.mrb[0].mxu0
    %v406 = vpop.f32.mrb[0].mxu0
    %407 = vdwg.mxu0
    %v408 = vmax.f32 %v403, 0.0
    %v409 = vld [vmem:[#allocation5] sm:$0xff]
    %v410 = vpack.c.bf16 %v409, %v409
    %v411 = vld [vmem:[#allocation8] sm:$0xf]
    %v412 = vld [vmem:[#allocation8 + $0x4] sm:$0xf]
    %v413 = vld [vmem:[#allocation8 + $0x8] sm:$0xf]
    %v414 = vld [vmem:[#allocation8 + $0xc] sm:$0xf]
    %v415 = vld [vmem:[#allocation8 + $0x10] sm:$0xf]
    %v416 = vld [vmem:[#allocation8 + $0x14] sm:$0xf]
    %v417 = vld [vmem:[#allocation8 + $0x18] sm:$0xf]
    %v418 = vld [vmem:[#allocation8 + $0x1c] sm:$0xf]
    %v419 = vld [vmem:[#allocation8 + $0x20] sm:$0xf]
    %v420 = vld [vmem:[#allocation8 + $0x24] sm:$0xf]
    %v421 = vld [vmem:[#allocation8 + $0x28] sm:$0xf]
    %v422 = vld [vmem:[#allocation8 + $0x2c] sm:$0xf]
    %v423 = vld [vmem:[#allocation8 + $0x30] sm:$0xf]
    %v424 = vld [vmem:[#allocation8 + $0x34] sm:$0xf]
    %v425 = vld [vmem:[#allocation8 + $0x38] sm:$0xf]
    %v426 = vld [vmem:[#allocation8 + $0x3c] sm:$0xf]
    %v427 = vld [vmem:[#allocation8 + $0x40] sm:$0xf]
    %v428 = vunpack.c.l.bf16 %v427
    %v429 = vlaneseq
    %v430 = vshrl.u32 %v429, 7
    %v431 = vsub.s32 0, %v430
    %v432 = vrot.slane %v428, %v431
    %v449 = vunpack.c.l.b16 %v411
    %v450 = vunpack.c.l.b16 %v412
    %v451 = vunpack.c.l.b16 %v413
    %v452 = vunpack.c.l.b16 %v414
    %v453 = vunpack.c.l.b16 %v415
    %v454 = vunpack.c.l.b16 %v416
    %v455 = vunpack.c.l.b16 %v417
    %v456 = vunpack.c.l.b16 %v418
    %v457 = vunpack.c.l.b16 %v419
    %v458 = vunpack.c.l.b16 %v420
    %v459 = vunpack.c.l.b16 %v421
    %v460 = vunpack.c.l.b16 %v422
    %v461 = vunpack.c.l.b16 %v423
    %v462 = vunpack.c.l.b16 %v424
    %v463 = vunpack.c.l.b16 %v425
    %v464 = vunpack.c.l.b16 %v426
    %v465 = vpack.c.b16 %v450, %v449
    %v466 = vpack.c.b16 %v452, %v451
    %v467 = vpack.c.b16 %v454, %v453
    %v468 = vpack.c.b16 %v456, %v455
    %v469 = vpack.c.b16 %v458, %v457
    %v470 = vpack.c.b16 %v460, %v459
    %v471 = vpack.c.b16 %v462, %v461
    %v472 = vpack.c.b16 %v464, %v463
    %481 = vmatprep.subr.bf16.mxu0 0
    %482 = vmatpush1.bf16.msra.mxu0 %v465
    %483 = vmatprep.subr.bf16.mxu0 0
    %484 = vmatpush1.bf16.msra.mxu0 %v466
    %485 = vmatprep.subr.bf16.mxu0 0
    %486 = vmatpush1.bf16.msra.mxu0 %v467
    %487 = vmatprep.subr.bf16.mxu0 0
    %488 = vmatpush1.bf16.msra.mxu0 %v468
    %489 = vmatprep.subr.bf16.mxu0 0
    %490 = vmatpush1.bf16.msra.mxu0 %v469
    %491 = vmatprep.subr.bf16.mxu0 0
    %492 = vmatpush1.bf16.msra.mxu0 %v470
    %493 = vmatprep.subr.bf16.mxu0 0
    %494 = vmatpush1.bf16.msra.mxu0 %v471
    %495 = vmatprep.subr.bf16.mxu0 0
    %496 = vmatpush1.bf16.msra.mxu0 %v472
    %497 = vmatprep.subr.bf16.mxu0 0
    %498 = vmatpush1.bf16.msra.mxu0 0
    %499 = vmatprep.subr.bf16.mxu0 0
    %500 = vmatpush1.bf16.msra.mxu0 0
    %501 = vmatprep.subr.bf16.mxu0 0
    %502 = vmatpush1.bf16.msra.mxu0 0
    %503 = vmatprep.subr.bf16.mxu0 0
    %504 = vmatpush1.bf16.msra.mxu0 0
    %505 = vmatprep.subr.bf16.mxu0 0
    %506 = vmatpush1.bf16.msra.mxu0 0
    %507 = vmatprep.subr.bf16.mxu0 0
    %508 = vmatpush1.bf16.msra.mxu0 0
    %509 = vmatprep.subr.bf16.mxu0 0
    %510 = vmatpush1.bf16.msra.mxu0 0
    %511 = vmatprep.subr.bf16.mxu0 0
    %512 = vmatpush1.bf16.msra.mxu0 0
    %513 = vmatprep.mubr.bf16.mxu0 0
    %514 = vmatmul.mubr.bf16.gmra.mrb[0].mxu0 %v410
    %v515 = vpop.f32.mrb[0].mxu0
    %v516 = vadd.f32 %v432, %v515
    %v517 = vpop.f32.mrb[0].mxu0
    %v518 = vpop.f32.mrb[0].mxu0
    %v519 = vpop.f32.mrb[0].mxu0
    %520 = vdwg.mxu0
    %v521 = vmax.f32 %v516, 0.0
    %v522 = vpack.c.bf16 %v521, %v521
    %s523 = scalar_lea.vmem [#allocation8], 72
    %v524 = vld [vmem:[%s523] sm:$0xf]
    %v525 = vld [vmem:[%s523 + $0x4] sm:$0xf]
    %v526 = vld [vmem:[%s523 + $0x8] sm:$0xf]
    %v527 = vld [vmem:[%s523 + $0xc] sm:$0xf]
    %v528 = vld [vmem:[%s523 + $0x10] sm:$0xf]
    %v529 = vld [vmem:[%s523 + $0x14] sm:$0xf]
    %v530 = vld [vmem:[%s523 + $0x18] sm:$0xf]
    %v531 = vld [vmem:[%s523 + $0x1c] sm:$0xf]
    %v532 = vld [vmem:[%s523 + $0x20] sm:$0xf]
    %v533 = vld [vmem:[%s523 + $0x24] sm:$0xf]
    %v534 = vld [vmem:[%s523 + $0x28] sm:$0xf]
    %v535 = vld [vmem:[%s523 + $0x2c] sm:$0xf]
    %v536 = vld [vmem:[%s523 + $0x30] sm:$0xf]
    %v537 = vld [vmem:[%s523 + $0x34] sm:$0xf]
    %v538 = vld [vmem:[%s523 + $0x38] sm:$0xf]
    %v539 = vld [vmem:[%s523 + $0x3c] sm:$0xf]
    %v540 = vld [vmem:[%s523 + $0x40] sm:$0xf]
    %v541 = vunpack.c.l.bf16 %v540
    %v542 = vlaneseq
    %v543 = vshrl.u32 %v542, 7
    %v544 = vsub.s32 0, %v543
    %v545 = vrot.slane %v541, %v544
    %v562 = vunpack.c.l.b16 %v524
    %v563 = vunpack.c.l.b16 %v525
    %v564 = vunpack.c.l.b16 %v526
    %v565 = vunpack.c.l.b16 %v527
    %v566 = vunpack.c.l.b16 %v528
    %v567 = vunpack.c.l.b16 %v529
    %v568 = vunpack.c.l.b16 %v530
    %v569 = vunpack.c.l.b16 %v531
    %v570 = vunpack.c.l.b16 %v532
    %v571 = vunpack.c.l.b16 %v533
    %v572 = vunpack.c.l.b16 %v534
    %v573 = vunpack.c.l.b16 %v535
    %v574 = vunpack.c.l.b16 %v536
    %v575 = vunpack.c.l.b16 %v537
    %v576 = vunpack.c.l.b16 %v538
    %v577 = vunpack.c.l.b16 %v539
    %v578 = vpack.c.b16 %v563, %v562
    %v579 = vpack.c.b16 %v565, %v564
    %v580 = vpack.c.b16 %v567, %v566
    %v581 = vpack.c.b16 %v569, %v568
    %v582 = vpack.c.b16 %v571, %v570
    %v583 = vpack.c.b16 %v573, %v572
    %v584 = vpack.c.b16 %v575, %v574
    %v585 = vpack.c.b16 %v577, %v576
    %594 = vmatprep.subr.bf16.mxu0 0
    %595 = vmatpush1.bf16.msra.mxu0 %v578
    %596 = vmatprep.subr.bf16.mxu0 0
    %597 = vmatpush1.bf16.msra.mxu0 %v579
    %598 = vmatprep.subr.bf16.mxu0 0
    %599 = vmatpush1.bf16.msra.mxu0 %v580
    %600 = vmatprep.subr.bf16.mxu0 0
    %601 = vmatpush1.bf16.msra.mxu0 %v581
    %602 = vmatprep.subr.bf16.mxu0 0
    %603 = vmatpush1.bf16.msra.mxu0 %v582
    %604 = vmatprep.subr.bf16.mxu0 0
    %605 = vmatpush1.bf16.msra.mxu0 %v583
    %606 = vmatprep.subr.bf16.mxu0 0
    %607 = vmatpush1.bf16.msra.mxu0 %v584
    %608 = vmatprep.subr.bf16.mxu0 0
    %609 = vmatpush1.bf16.msra.mxu0 %v585
    %610 = vmatprep.subr.bf16.mxu0 0
    %611 = vmatpush1.bf16.msra.mxu0 0
    %612 = vmatprep.subr.bf16.mxu0 0
    %613 = vmatpush1.bf16.msra.mxu0 0
    %614 = vmatprep.subr.bf16.mxu0 0
    %615 = vmatpush1.bf16.msra.mxu0 0
    %616 = vmatprep.subr.bf16.mxu0 0
    %617 = vmatpush1.bf16.msra.mxu0 0
    %618 = vmatprep.subr.bf16.mxu0 0
    %619 = vmatpush1.bf16.msra.mxu0 0
    %620 = vmatprep.subr.bf16.mxu0 0
    %621 = vmatpush1.bf16.msra.mxu0 0
    %622 = vmatprep.subr.bf16.mxu0 0
    %623 = vmatpush1.bf16.msra.mxu0 0
    %624 = vmatprep.subr.bf16.mxu0 0
    %625 = vmatpush1.bf16.msra.mxu0 0
    %626 = vmatprep.mubr.bf16.mxu0 0
    %627 = vmatmul.mubr.bf16.gmra.mrb[0].mxu0 %v522
    %v628 = vpop.f32.mrb[0].mxu0
    %v629 = vadd.f32 %v545, %v628
    %v630 = vpop.f32.mrb[0].mxu0
    %v631 = vpop.f32.mrb[0].mxu0
    %v632 = vpop.f32.mrb[0].mxu0
    %633 = vdwg.mxu0
    %v634 = vmax.f32 %v629, 0.0
    %v635 = vpack.c.bf16 %v634, %v634
    %s636 = scalar_lea.vmem [#allocation8], 144
    %v637 = vld [vmem:[%s636] sm:$0xf]
    %v638 = vld [vmem:[%s636 + $0x4] sm:$0xf]
    %v639 = vld [vmem:[%s636 + $0x8] sm:$0xf]
    %v640 = vld [vmem:[%s636 + $0xc] sm:$0xf]
    %v641 = vld [vmem:[%s636 + $0x10] sm:$0xf]
    %v642 = vld [vmem:[%s636 + $0x14] sm:$0xf]
    %v643 = vld [vmem:[%s636 + $0x18] sm:$0xf]
    %v644 = vld [vmem:[%s636 + $0x1c] sm:$0xf]
    %v645 = vld [vmem:[%s636 + $0x20] sm:$0xf]
    %v646 = vld [vmem:[%s636 + $0x24] sm:$0xf]
    %v647 = vld [vmem:[%s636 + $0x28] sm:$0xf]
    %v648 = vld [vmem:[%s636 + $0x2c] sm:$0xf]
    %v649 = vld [vmem:[%s636 + $0x30] sm:$0xf]
    %v650 = vld [vmem:[%s636 + $0x34] sm:$0xf]
    %v651 = vld [vmem:[%s636 + $0x38] sm:$0xf]
    %v652 = vld [vmem:[%s636 + $0x3c] sm:$0xf]
    %v653 = vld [vmem:[%s636 + $0x40] sm:$0xf]
    %v654 = vunpack.c.l.bf16 %v653
    %v655 = vlaneseq
    %v656 = vshrl.u32 %v655, 7
    %v657 = vsub.s32 0, %v656
    %v658 = vrot.slane %v654, %v657
    %v675 = vunpack.c.l.b16 %v637
    %v676 = vunpack.c.l.b16 %v638
    %v677 = vunpack.c.l.b16 %v639
    %v678 = vunpack.c.l.b16 %v640
    %v679 = vunpack.c.l.b16 %v641
    %v680 = vunpack.c.l.b16 %v642
    %v681 = vunpack.c.l.b16 %v643
    %v682 = vunpack.c.l.b16 %v644
    %v683 = vunpack.c.l.b16 %v645
    %v684 = vunpack.c.l.b16 %v646
    %v685 = vunpack.c.l.b16 %v647
    %v686 = vunpack.c.l.b16 %v648
    %v687 = vunpack.c.l.b16 %v649
    %v688 = vunpack.c.l.b16 %v650
    %v689 = vunpack.c.l.b16 %v651
    %v690 = vunpack.c.l.b16 %v652
    %v691 = vpack.c.b16 %v676, %v675
    %v692 = vpack.c.b16 %v678, %v677
    %v693 = vpack.c.b16 %v680, %v679
    %v694 = vpack.c.b16 %v682, %v681
    %v695 = vpack.c.b16 %v684, %v683
    %v696 = vpack.c.b16 %v686, %v685
    %v697 = vpack.c.b16 %v688, %v687
    %v698 = vpack.c.b16 %v690, %v689
    %707 = vmatprep.subr.bf16.mxu0 0
    %708 = vmatpush1.bf16.msra.mxu0 %v691
    %709 = vmatprep.subr.bf16.mxu0 0
    %710 = vmatpush1.bf16.msra.mxu0 %v692
    %711 = vmatprep.subr.bf16.mxu0 0
    %712 = vmatpush1.bf16.msra.mxu0 %v693
    %713 = vmatprep.subr.bf16.mxu0 0
    %714 = vmatpush1.bf16.msra.mxu0 %v694
    %715 = vmatprep.subr.bf16.mxu0 0
    %716 = vmatpush1.bf16.msra.mxu0 %v695
    %717 = vmatprep.subr.bf16.mxu0 0
    %718 = vmatpush1.bf16.msra.mxu0 %v696
    %719 = vmatprep.subr.bf16.mxu0 0
    %720 = vmatpush1.bf16.msra.mxu0 %v697
    %721 = vmatprep.subr.bf16.mxu0 0
    %722 = vmatpush1.bf16.msra.mxu0 %v698
    %723 = vmatprep.subr.bf16.mxu0 0
    %724 = vmatpush1.bf16.msra.mxu0 0
    %725 = vmatprep.subr.bf16.mxu0 0
    %726 = vmatpush1.bf16.msra.mxu0 0
    %727 = vmatprep.subr.bf16.mxu0 0
    %728 = vmatpush1.bf16.msra.mxu0 0
    %729 = vmatprep.subr.bf16.mxu0 0
    %730 = vmatpush1.bf16.msra.mxu0 0
    %731 = vmatprep.subr.bf16.mxu0 0
    %732 = vmatpush1.bf16.msra.mxu0 0
    %733 = vmatprep.subr.bf16.mxu0 0
    %734 = vmatpush1.bf16.msra.mxu0 0
    %735 = vmatprep.subr.bf16.mxu0 0
    %736 = vmatpush1.bf16.msra.mxu0 0
    %737 = vmatprep.subr.bf16.mxu0 0
    %738 = vmatpush1.bf16.msra.mxu0 0
    %739 = vmatprep.mubr.bf16.mxu0 0
    %740 = vmatmul.mubr.bf16.gmra.mrb[0].mxu0 %v635
    %v741 = vpop.f32.mrb[0].mxu0
    %v742 = vadd.f32 %v658, %v741
    %v743 = vpop.f32.mrb[0].mxu0
    %v744 = vpop.f32.mrb[0].mxu0
    %v745 = vpop.f32.mrb[0].mxu0
    %746 = vdwg.mxu0
    %v747 = vmax.f32 %v742, 0.0
    %v748 = vmul.f32 %v408, %v747
    %749 = vadd.xlane.f32.xlu0 %v748
    %v750 = vpop.xlane.xlu0 %749
    %751 = vmatprep.subr.mxu0 0.0
    %752 = vmatpush1.xpose.msra.mxu0 %v408
    %753 = vmatprep.subr.mxu0 0.0
    %754 = vmatpush1.xpose.msra.mxu0 0.0
    %755 = vmatprep.subr.mxu0 0.0
    %756 = vmatpush1.xpose.msra.mxu0 0.0
    %757 = vmatprep.subr.mxu0 0.0
    %758 = vmatpush1.xpose.msra.mxu0 0.0
    %759 = vmatprep.subr.mxu0 0.0
    %760 = vmatpush1.xpose.msra.mxu0 0.0
    %761 = vmatprep.subr.mxu0 0.0
    %762 = vmatpush1.xpose.msra.mxu0 0.0
    %763 = vmatprep.subr.mxu0 0.0
    %764 = vmatpush1.xpose.msra.mxu0 0.0
    %765 = vmatprep.subr.mxu0 0.0
    %766 = vmatpush1.xpose.msra.mxu0 0.0
    %767 = vmatprep.subr.mxu0 0.0
    %768 = vmatpush1.xpose.msra.mxu0 0.0
    %769 = vmatprep.subr.mxu0 0.0
    %770 = vmatpush1.xpose.msra.mxu0 0.0
    %771 = vmatprep.subr.mxu0 0.0
    %772 = vmatpush1.xpose.msra.mxu0 0.0
    %773 = vmatprep.subr.mxu0 0.0
    %774 = vmatpush1.xpose.msra.mxu0 0.0
    %775 = vmatprep.subr.mxu0 0.0
    %776 = vmatpush1.xpose.msra.mxu0 0.0
    %777 = vmatprep.subr.mxu0 0.0
    %778 = vmatpush1.xpose.msra.mxu0 0.0
    %779 = vmatprep.subr.mxu0 0.0
    %780 = vmatpush1.xpose.msra.mxu0 0.0
    %781 = vmatprep.subr.mxu0 0.0
    %782 = vmatpush1.xpose.msra.mxu0 0.0
    %783 = vmatprep.subr.mxu0 0.0
    %784 = vmatpush1.xpose.msra.mxu0 0.0
    %785 = vmatprep.subr.mxu0 0.0
    %786 = vmatpush1.xpose.msra.mxu0 0.0
    %787 = vmatprep.subr.mxu0 0.0
    %788 = vmatpush1.xpose.msra.mxu0 0.0
    %789 = vmatprep.subr.mxu0 0.0
    %790 = vmatpush1.xpose.msra.mxu0 0.0
    %791 = vmatprep.subr.mxu0 0.0
    %792 = vmatpush1.xpose.msra.mxu0 0.0
    %793 = vmatprep.subr.mxu0 0.0
    %794 = vmatpush1.xpose.msra.mxu0 0.0
    %795 = vmatprep.subr.mxu0 0.0
    %796 = vmatpush1.xpose.msra.mxu0 0.0
    %797 = vmatprep.subr.mxu0 0.0
    %798 = vmatpush1.xpose.msra.mxu0 0.0
    %799 = vmatprep.subr.mxu0 0.0
    %800 = vmatpush1.xpose.msra.mxu0 0.0
    %801 = vmatprep.subr.mxu0 0.0
    %802 = vmatpush1.xpose.msra.mxu0 0.0
    %803 = vmatprep.subr.mxu0 0.0
    %804 = vmatpush1.xpose.msra.mxu0 0.0
    %805 = vmatprep.subr.mxu0 0.0
    %806 = vmatpush1.xpose.msra.mxu0 0.0
    %807 = vmatprep.subr.mxu0 0.0
    %808 = vmatpush1.xpose.msra.mxu0 0.0
    %809 = vmatprep.subr.mxu0 0.0
    %810 = vmatpush1.xpose.msra.mxu0 0.0
    %811 = vmatprep.subr.mxu0 0.0
    %812 = vmatpush1.xpose.msra.mxu0 0.0
    %813 = vmatprep.subr.mxu0 0.0
    %814 = vmatpush1.xpose.msra.mxu0 0.0
    %815 = vmatprep.mubr.f32.mxu0 0.0
    %816 = vmatmul.mubr.f32.gmra.mrb[0].mxu0 %v747
    %v817 = vpop.f32.mrb[0].mxu0
    %v818 = vadd.f32 0.0, %v817
    %v819 = vpop.f32.mrb[0].mxu0
    %820 = vdwg.mxu0
    %v821 = vlaneseq
    %v822 = vshrl.u32 %v821, 7
    %v823 = vlaneseq
    %v824 = vand.u32 %v823, 127
    %vm825 = vcmp.eq.s32.totalorder %v822, %v824
    %v826 = vsel %vm825, -10.0, %v818
    %vm827 = vcmask 64512
    %v828 = vsel %vm827, %v826, -inf
    %829 = vmax.xlane.f32.xlu0 %v828
    %v830 = vpop.xlane.xlu0 %829
    %v831 = vmax.f32 %v830, %v750
    %v832 = vsub.f32 %v750, %v831
    %v833 = vmul.f32 %v832, 1.442695
    %v834 = vpow.pop %v833
    %v835 = vsub.f32 %v826, %v831
    %v836 = vmul.f32 %v835, 1.442695
    %v837 = vpow.pop %v836
    %v838 = vsel %vm827, %v837, 0.0
    %839 = vadd.xlane.f32.xlu0 %v838
    %v840 = vpop.xlane.xlu0 %839
    %v841 = vadd.f32 %v834, %v840
    %v842 = vlog2.pop %v841
    %v843 = vmul.f32 %v842, 0.6931472
    %v844 = vadd.f32 %v831, %v843
    %v845 = vsub.f32 %v750, %v844
    %vm846 = vcmask 7168
    %v847 = vsel %vm846, %v845, 0.0
    %848 = vadd.xlane.f32.xlu0 %v847
    %v849 = vpop.xlane.xlu0 %848
    %v850 = vrot.slane %v849, 4
    %v851 = vadd.f32 %v849, %v850
    %v852 = vrot.slane %v851, 2
    %v853 = vadd.f32 %v851, %v852
    %v854 = vrot.slane %v853, 1
    %v855 = vadd.f32 %v853, %v854
    %s856 = vtos %v855
    %s857 = ssub.f32 0.0, %s856
    %v858 = vrcp.pop 8.0
    %s859 = vtos %v858
    %s860 = smul.f32 %s857, %s859
    %s861 = scalar_lea.smem [#allocation10], 0
    %862 = sst [smem:[%s861]] %s860
    // Predicated region
    $region34: #{contrastive_loss_forward.1} parent=1 // pred_check
      _
    $region35: #{contrastive_loss_forward.1} parent=1 // pred_check_branch
      %864 = sbr.rel (0) target = $region37
    $region36: #{contrastive_loss_forward.1} parent=1 // pred_region
      %s866 = ssub.s32 16, 16
      %867 = vsyncadd [#allocation4], %s866
      %870 = dma.smem_to_hbm [#allocation10], 16, %s4, [#allocation4]
    $region37: #{contrastive_loss_forward.1} parent=1 // pred_fallthru
      _
    // Predicated region
    $region38: #{contrastive_loss_forward.1} parent=1 // pred_check
      _
    $region39: #{contrastive_loss_forward.1} parent=1 // pred_check_branch
      %872 = sbr.rel (0) target = $region41
    $region40: #{contrastive_loss_forward.1} parent=1 // pred_region
      %873 = dma.done [#allocation4], 16
    $region41: #{contrastive_loss_forward.1} parent=1 // pred_fallthru
      _
    %874 = sfence
    %875 = vsyncpa [#allocation3], 1
    %876 = vsyncpa [#allocation6], 1
    %877 = vsyncpa [#allocation9], 1
    %878 = vsyncpa [#allocation4], 1

</llo_original>
